<compile_context>
chip_gen: v7x
topology: tpu7x:2x2x1
jax: 0.10.0
libtpu: 0.0.40
codegen_flags: <defaults>
</compile_context>

<pallas_src>
import jax
import jax.numpy as jnp
from jax import lax
from jax.experimental import pallas as pl
from jax.experimental.pallas import tpu as pltpu

INPUT_SIZE = 3
HIDDEN_SIZE = 32
OUTPUT_SIZE = 3
LANE = 128  # lane-dense output width


def lstm_kernel(x_ref, wih_ref, bias_ref, whh_ref, wfc_ref, bfc_ref, out_ref, xp_ref):
    """x_ref:    (B, S, I)   raw input (batch_first, as given to the model)
       wih_ref:  (I, 4H)     W_ih^T
       bias_ref: (1, 4H)     b_ih + b_hh (fused)
       whh_ref:  (H, 4H)     W_hh^T
       wfc_ref:  (H, LANE)   W_fc^T zero-padded to 128 lanes
       bfc_ref:  (1, LANE)   b_fc zero-padded to 128 lanes
       out_ref:  (B, LANE)   fc(h_T) in the first OUTPUT_SIZE lanes
       xp_ref:   (B*S, 4H)   VMEM scratch: pre-projected inputs, row b*S + t
    """
    B, S, I = x_ref.shape
    H = whh_ref.shape[0]
    G = 4 * H

    # ---- Input projection hoisted out of the recurrence (in-kernel, VPU only) ----
    # xp[b*S + t, :] = x[b, t, :] @ W_ih^T + (b_ih + b_hh)
    x2d = x_ref[...].reshape(B * S, I)                 # layout no-op (merge leading dims)
    acc = bias_ref[...] + x2d[:, 0:1] * wih_ref[0:1, :]
    for i in range(1, I):                              # I = 3: lane-broadcast FMAs
        acc = acc + x2d[:, i:i + 1] * wih_ref[i:i + 1, :]
    xp_ref[...] = acc

    whh = whh_ref[...]                                 # (H, 4H) resident across the loop

    def step(t, carry):
        h, c = carry
        # Gather this timestep's pre-projected rows (row b*S + t for each batch b).
        xt = jnp.concatenate(
            [xp_ref[pl.ds(b * S + t, 1), :] for b in range(B)], axis=0)   # (B, 4H)
        gates = xt + jnp.dot(h, whh, preferred_element_type=jnp.float32)  # (B, 4H)
        sig = jax.nn.sigmoid(gates)          # one EUP pass over the full 128-lane vreg
        i_g = sig[:, 0 * H:1 * H]
        f_g = sig[:, 1 * H:2 * H]
        o_g = sig[:, 3 * H:4 * H]
        g_g = jnp.tanh(gates[:, 2 * H:3 * H])
        c_new = f_g * c + i_g * g_g
        h_new = o_g * jnp.tanh(c_new)
        return h_new, c_new

    h0 = jnp.zeros((B, H), jnp.float32)
    c0 = jnp.zeros((B, H), jnp.float32)
    h_fin, _ = lax.fori_loop(0, S, step, (h0, c0), unroll=True)

    # fc(h_T): lane-dense (B, 128) store; the wrapper slices the first O lanes.
    out_ref[...] = (jnp.dot(h_fin, wfc_ref[...], preferred_element_type=jnp.float32)
                    + bfc_ref[...]).astype(out_ref.dtype)


def prepare_params(params):
    """One-time layout prep (transposes, bias fusion, lane padding) — not on the
    per-call forward path."""
    H, I, O = HIDDEN_SIZE, INPUT_SIZE, OUTPUT_SIZE
    wih_t = jnp.asarray(params["w_ih"], jnp.float32).T                    # (I, 4H)
    bias = (params["b_ih"] + params["b_hh"]).astype(jnp.float32).reshape(1, 4 * H)
    whh_t = jnp.asarray(params["w_hh"], jnp.float32).T                    # (H, 4H)
    wfc_pad = jnp.zeros((H, LANE), jnp.float32).at[:, :O].set(
        jnp.asarray(params["w_fc"], jnp.float32).T)                       # (H, LANE)
    bfc_pad = jnp.zeros((1, LANE), jnp.float32).at[:, :O].set(
        jnp.asarray(params["b_fc"], jnp.float32).reshape(1, O))           # (1, LANE)
    return {"wih_t": wih_t, "bias": bias, "whh_t": whh_t,
            "wfc_pad": wfc_pad, "bfc_pad": bfc_pad}


def lstm_model_forward(x, prepared):
    """x: (batch, seq, input) float32 -> (batch, output) float32."""
    B, S, I = x.shape
    H, O = HIDDEN_SIZE, OUTPUT_SIZE
    assert I == INPUT_SIZE
    # VMEM residency guard for the gridless design (see header note).
    assert B * S * 4 * H * 4 < 16 * 1024 * 1024, "sequence too long for gridless design"

    # Advisory cost hint: projection + recurrence + fc FLOPs, sigmoid/tanh count,
    # and total bytes touched by the custom call.
    flops = 2 * B * S * I * 4 * H + 2 * S * B * H * 4 * H + 2 * B * H * LANE
    transcendentals = S * (B * 4 * H + 2 * B * H)
    bytes_accessed = 4 * (B * S * I + I * 4 * H + 4 * H + H * 4 * H
                          + H * LANE + LANE + B * LANE)

    out_pad = pl.pallas_call(
        lstm_kernel,
        out_shape=jax.ShapeDtypeStruct((B, LANE), jnp.float32),
        in_specs=[pl.BlockSpec(memory_space=pltpu.MemorySpace.VMEM)] * 6,
        out_specs=pl.BlockSpec(memory_space=pltpu.MemorySpace.VMEM),
        scratch_shapes=[pltpu.VMEM((B * S, 4 * H), jnp.float32)],
        cost_estimate=pl.CostEstimate(flops=flops,
                                      transcendentals=transcendentals,
                                      bytes_accessed=bytes_accessed),
    )(x, prepared["wih_t"], prepared["bias"], prepared["whh_t"],
      prepared["wfc_pad"], prepared["bfc_pad"])
    return out_pad[:, :O]


def init_params(key):
    """Deterministic init mimicking PyTorch's uniform(-1/sqrt(H), 1/sqrt(H))."""
    H, I, O = HIDDEN_SIZE, INPUT_SIZE, OUTPUT_SIZE
    ks = jax.random.split(key, 6)
    bound = 1.0 / jnp.sqrt(jnp.float32(H))
    u = lambda k, shape: jax.random.uniform(k, shape, jnp.float32, -bound, bound)
    return {
        "w_ih": u(ks[0], (4 * H, I)),
        "w_hh": u(ks[1], (4 * H, H)),
        "b_ih": u(ks[2], (4 * H,)),
        "b_hh": u(ks[3], (4 * H,)),
        "w_fc": u(ks[4], (O, H)),
        "b_fc": u(ks[5], (O,)),
    }


def reference_forward(x, params):
    """Pure-JAX reference (PyTorch LSTM semantics) for verification."""
    H = HIDDEN_SIZE
    w_ih, w_hh = params["w_ih"], params["w_hh"]
    b = params["b_ih"] + params["b_hh"]
    B = x.shape[0]

    def step(carry, x_t):
        h, c = carry
        gates = x_t @ w_ih.T + h @ w_hh.T + b
        i = jax.nn.sigmoid(gates[:, 0 * H:1 * H])
        f = jax.nn.sigmoid(gates[:, 1 * H:2 * H])
        g = jnp.tanh(gates[:, 2 * H:3 * H])
        o = jax.nn.sigmoid(gates[:, 3 * H:4 * H])
        c = f * c + i * g
        h = o * jnp.tanh(c)
        return (h, c), None

    h0 = jnp.zeros((B, H), jnp.float32)
    (h, _), _ = lax.scan(step, (h0, h0), jnp.transpose(x, (1, 0, 2)))
    return h @ params["w_fc"].T + params["b_fc"]


if __name__ == "__main__":
    key = jax.random.PRNGKey(0)
    k_param, k_x = jax.random.split(key)
    params = init_params(k_param)
    prepared = prepare_params(params)          # one-time layout prep

    batch, seq = 2, 8
    x = jax.random.normal(k_x, (batch, seq, INPUT_SIZE), jnp.float32)

    fwd = jax.jit(lstm_model_forward)
    out = jax.block_until_ready(fwd(x, prepared))

    ref = reference_forward(x, params)
    assert out.shape == (batch, OUTPUT_SIZE)
    assert jnp.allclose(out, ref, atol=1e-4, rtol=1e-4), (out, ref)
    print("KERNEL_OK")
</pallas_src>

<mosaic_0001>
module attributes {stable_mosaic.version = 11 : i64} {
  func.func @lstm_kernel(%arg0: memref<2x8x3xf32, #tpu.memory_space<vmem>>, %arg1: memref<3x128xf32, #tpu.memory_space<vmem>>, %arg2: memref<1x128xf32, #tpu.memory_space<vmem>>, %arg3: memref<32x128xf32, #tpu.memory_space<vmem>>, %arg4: memref<32x128xf32, #tpu.memory_space<vmem>>, %arg5: memref<1x128xf32, #tpu.memory_space<vmem>>, %arg6: memref<2x128xf32, #tpu.memory_space<vmem>>, %arg7: memref<16x128xf32, #tpu.memory_space<vmem>>) attributes {dimension_semantics = [], scalar_prefetch = 0 : i64, scratch_operands = 1 : i64, tpu.core_type = #tpu.core_type<tc>} {
    %c0 = arith.constant 0 : index
    %c0_0 = arith.constant 0 : index
    %c0_1 = arith.constant 0 : index
    %0 = vector.load %arg0[%c0, %c0_0, %c0_1] : memref<2x8x3xf32, #tpu.memory_space<vmem>>, vector<2x8x3xf32>
    %1 = vector.shape_cast %0 : vector<2x8x3xf32> to vector<16x3xf32>
    %c0_2 = arith.constant 0 : index
    %c0_3 = arith.constant 0 : index
    %2 = vector.load %arg2[%c0_2, %c0_3] : memref<1x128xf32, #tpu.memory_space<vmem>>, vector<1x128xf32>
    %3 = vector.extract_strided_slice %1 {offsets = [0, 0], sizes = [16, 1], strides = [1, 1]} : vector<16x3xf32> to vector<16x1xf32>
    %c0_4 = arith.constant 0 : index
    %c0_5 = arith.constant 0 : index
    %4 = vector.load %arg1[%c0_4, %c0_5] : memref<3x128xf32, #tpu.memory_space<vmem>>, vector<1x128xf32>
    %5 = vector.broadcast %3 : vector<16x1xf32> to vector<16x128xf32>
    %6 = vector.broadcast %4 : vector<1x128xf32> to vector<16x128xf32>
    %7 = arith.mulf %5, %6 : vector<16x128xf32>
    %8 = vector.broadcast %2 : vector<1x128xf32> to vector<16x128xf32>
    %9 = arith.addf %8, %7 : vector<16x128xf32>
    %10 = vector.extract_strided_slice %1 {offsets = [0, 1], sizes = [16, 1], strides = [1, 1]} : vector<16x3xf32> to vector<16x1xf32>
    %c1 = arith.constant 1 : index
    %c0_6 = arith.constant 0 : index
    %11 = vector.load %arg1[%c1, %c0_6] : memref<3x128xf32, #tpu.memory_space<vmem>>, vector<1x128xf32>
    %12 = vector.broadcast %10 : vector<16x1xf32> to vector<16x128xf32>
    %13 = vector.broadcast %11 : vector<1x128xf32> to vector<16x128xf32>
    %14 = arith.mulf %12, %13 : vector<16x128xf32>
    %15 = arith.addf %9, %14 : vector<16x128xf32>
    %16 = vector.extract_strided_slice %1 {offsets = [0, 2], sizes = [16, 1], strides = [1, 1]} : vector<16x3xf32> to vector<16x1xf32>
    %c2 = arith.constant 2 : index
    %c0_7 = arith.constant 0 : index
    %17 = vector.load %arg1[%c2, %c0_7] : memref<3x128xf32, #tpu.memory_space<vmem>>, vector<1x128xf32>
    %18 = vector.broadcast %16 : vector<16x1xf32> to vector<16x128xf32>
    %19 = vector.broadcast %17 : vector<1x128xf32> to vector<16x128xf32>
    %20 = arith.mulf %18, %19 : vector<16x128xf32>
    %21 = arith.addf %15, %20 : vector<16x128xf32>
    %c0_8 = arith.constant 0 : index
    %c0_9 = arith.constant 0 : index
    %22 = vector.load %arg7[%c0_8, %c0_9] : memref<16x128xf32, #tpu.memory_space<vmem>>, vector<16x128xf32>
    tpu.vector_store %arg7[%c0_8, %c0_9], %21 {strides = array<i32>} : memref<16x128xf32, #tpu.memory_space<vmem>>, vector<16x128xf32>,
    %c0_10 = arith.constant 0 : index
    %c0_11 = arith.constant 0 : index
    %23 = vector.load %arg3[%c0_10, %c0_11] : memref<32x128xf32, #tpu.memory_space<vmem>>, vector<32x128xf32>
    %cst = arith.constant 0.000000e+00 : f32
    %24 = vector.broadcast %cst : f32 to vector<2x32xf32>
    %cst_12 = arith.constant 0.000000e+00 : f32
    %25 = vector.broadcast %cst_12 : f32 to vector<2x32xf32>
    %c0_i32 = arith.constant 0 : i32
    %c0_i32_13 = arith.constant 0 : i32
    %26 = arith.addi %c0_i32_13, %c0_i32 : i32
    %27 = arith.index_cast %26 : i32 to index
    %c0_14 = arith.constant 0 : index
    %28 = vector.load %arg7[%27, %c0_14] : memref<16x128xf32, #tpu.memory_space<vmem>>, vector<1x128xf32>
    %c8_i32 = arith.constant 8 : i32
    %29 = arith.addi %c8_i32, %c0_i32 : i32
    %30 = arith.index_cast %29 : i32 to index
    %c0_15 = arith.constant 0 : index
    %31 = vector.load %arg7[%30, %c0_15] : memref<16x128xf32, #tpu.memory_space<vmem>>, vector<1x128xf32>
    %32 = tpu.concatenate %28, %31 in 0 : vector<1x128xf32>, vector<1x128xf32> -> vector<2x128xf32>
    %cst_16 = arith.constant dense<0.000000e+00> : vector<2x128xf32>
    %33 = tpu.matmul %24, %23, %cst_16 {dimension_numbers = #tpu.dot_dimension_numbers<[1], [0], [0], [1], [0, 0, 1, 1], [], []>} : vector<2x32xf32>, vector<32x128xf32>, vector<2x128xf32> -> vector<2x128xf32>
    %34 = arith.addf %32, %33 : vector<2x128xf32>
    %35 = arith.negf %34 : vector<2x128xf32>
    %36 = math.exp %35 : vector<2x128xf32>
    %cst_17 = arith.constant 1.000000e+00 : f32
    %37 = vector.broadcast %cst_17 : f32 to vector<2x128xf32>
    %38 = arith.addf %37, %36 : vector<2x128xf32>
    %39 = arith.divf %37, %38 : vector<2x128xf32>
    %40 = vector.extract_strided_slice %39 {offsets = [0, 0], sizes = [2, 32], strides = [1, 1]} : vector<2x128xf32> to vector<2x32xf32>
    %41 = vector.extract_strided_slice %39 {offsets = [0, 32], sizes = [2, 32], strides = [1, 1]} : vector<2x128xf32> to vector<2x32xf32>
    %42 = vector.extract_strided_slice %39 {offsets = [0, 96], sizes = [2, 32], strides = [1, 1]} : vector<2x128xf32> to vector<2x32xf32>
    %43 = vector.extract_strided_slice %34 {offsets = [0, 64], sizes = [2, 32], strides = [1, 1]} : vector<2x128xf32> to vector<2x32xf32>
    %44 = math.tanh %43 : vector<2x32xf32>
    %45 = arith.mulf %41, %25 : vector<2x32xf32>
    %46 = arith.mulf %40, %44 : vector<2x32xf32>
    %47 = arith.addf %45, %46 : vector<2x32xf32>
    %48 = math.tanh %47 : vector<2x32xf32>
    %49 = arith.mulf %42, %48 : vector<2x32xf32>
    %c1_i32 = arith.constant 1 : i32
    %c0_i32_18 = arith.constant 0 : i32
    %50 = arith.addi %c0_i32_18, %c1_i32 : i32
    %51 = arith.index_cast %50 : i32 to index
    %c0_19 = arith.constant 0 : index
    %52 = vector.load %arg7[%51, %c0_19] : memref<16x128xf32, #tpu.memory_space<vmem>>, vector<1x128xf32>
    %c8_i32_20 = arith.constant 8 : i32
    %53 = arith.addi %c8_i32_20, %c1_i32 : i32
    %54 = arith.index_cast %53 : i32 to index
    %c0_21 = arith.constant 0 : index
    %55 = vector.load %arg7[%54, %c0_21] : memref<16x128xf32, #tpu.memory_space<vmem>>, vector<1x128xf32>
    %56 = tpu.concatenate %52, %55 in 0 : vector<1x128xf32>, vector<1x128xf32> -> vector<2x128xf32>
    %cst_22 = arith.constant dense<0.000000e+00> : vector<2x128xf32>
    %57 = tpu.matmul %49, %23, %cst_22 {dimension_numbers = #tpu.dot_dimension_numbers<[1], [0], [0], [1], [0, 0, 1, 1], [], []>} : vector<2x32xf32>, vector<32x128xf32>, vector<2x128xf32> -> vector<2x128xf32>
    %58 = arith.addf %56, %57 : vector<2x128xf32>
    %59 = arith.negf %58 : vector<2x128xf32>
    %60 = math.exp %59 : vector<2x128xf32>
    %cst_23 = arith.constant 1.000000e+00 : f32
    %61 = vector.broadcast %cst_23 : f32 to vector<2x128xf32>
    %62 = arith.addf %61, %60 : vector<2x128xf32>
    %63 = arith.divf %61, %62 : vector<2x128xf32>
    %64 = vector.extract_strided_slice %63 {offsets = [0, 0], sizes = [2, 32], strides = [1, 1]} : vector<2x128xf32> to vector<2x32xf32>
    %65 = vector.extract_strided_slice %63 {offsets = [0, 32], sizes = [2, 32], strides = [1, 1]} : vector<2x128xf32> to vector<2x32xf32>
    %66 = vector.extract_strided_slice %63 {offsets = [0, 96], sizes = [2, 32], strides = [1, 1]} : vector<2x128xf32> to vector<2x32xf32>
    %67 = vector.extract_strided_slice %58 {offsets = [0, 64], sizes = [2, 32], strides = [1, 1]} : vector<2x128xf32> to vector<2x32xf32>
    %68 = math.tanh %67 : vector<2x32xf32>
    %69 = arith.mulf %65, %47 : vector<2x32xf32>
    %70 = arith.mulf %64, %68 : vector<2x32xf32>
    %71 = arith.addf %69, %70 : vector<2x32xf32>
    %72 = math.tanh %71 : vector<2x32xf32>
    %73 = arith.mulf %66, %72 : vector<2x32xf32>
    %c2_i32 = arith.constant 2 : i32
    %c0_i32_24 = arith.constant 0 : i32
    %74 = arith.addi %c0_i32_24, %c2_i32 : i32
    %75 = arith.index_cast %74 : i32 to index
    %c0_25 = arith.constant 0 : index
    %76 = vector.load %arg7[%75, %c0_25] : memref<16x128xf32, #tpu.memory_space<vmem>>, vector<1x128xf32>
    %c8_i32_26 = arith.constant 8 : i32
    %77 = arith.addi %c8_i32_26, %c2_i32 : i32
    %78 = arith.index_cast %77 : i32 to index
    %c0_27 = arith.constant 0 : index
    %79 = vector.load %arg7[%78, %c0_27] : memref<16x128xf32, #tpu.memory_space<vmem>>, vector<1x128xf32>
    %80 = tpu.concatenate %76, %79 in 0 : vector<1x128xf32>, vector<1x128xf32> -> vector<2x128xf32>
    %cst_28 = arith.constant dense<0.000000e+00> : vector<2x128xf32>
    %81 = tpu.matmul %73, %23, %cst_28 {dimension_numbers = #tpu.dot_dimension_numbers<[1], [0], [0], [1], [0, 0, 1, 1], [], []>} : vector<2x32xf32>, vector<32x128xf32>, vector<2x128xf32> -> vector<2x128xf32>
    %82 = arith.addf %80, %81 : vector<2x128xf32>
    %83 = arith.negf %82 : vector<2x128xf32>
    %84 = math.exp %83 : vector<2x128xf32>
    %cst_29 = arith.constant 1.000000e+00 : f32
    %85 = vector.broadcast %cst_29 : f32 to vector<2x128xf32>
    %86 = arith.addf %85, %84 : vector<2x128xf32>
    %87 = arith.divf %85, %86 : vector<2x128xf32>
    %88 = vector.extract_strided_slice %87 {offsets = [0, 0], sizes = [2, 32], strides = [1, 1]} : vector<2x128xf32> to vector<2x32xf32>
    %89 = vector.extract_strided_slice %87 {offsets = [0, 32], sizes = [2, 32], strides = [1, 1]} : vector<2x128xf32> to vector<2x32xf32>
    %90 = vector.extract_strided_slice %87 {offsets = [0, 96], sizes = [2, 32], strides = [1, 1]} : vector<2x128xf32> to vector<2x32xf32>
    %91 = vector.extract_strided_slice %82 {offsets = [0, 64], sizes = [2, 32], strides = [1, 1]} : vector<2x128xf32> to vector<2x32xf32>
    %92 = math.tanh %91 : vector<2x32xf32>
    %93 = arith.mulf %89, %71 : vector<2x32xf32>
    %94 = arith.mulf %88, %92 : vector<2x32xf32>
    %95 = arith.addf %93, %94 : vector<2x32xf32>
    %96 = math.tanh %95 : vector<2x32xf32>
    %97 = arith.mulf %90, %96 : vector<2x32xf32>
    %c3_i32 = arith.constant 3 : i32
    %c0_i32_30 = arith.constant 0 : i32
    %98 = arith.addi %c0_i32_30, %c3_i32 : i32
    %99 = arith.index_cast %98 : i32 to index
    %c0_31 = arith.constant 0 : index
    %100 = vector.load %arg7[%99, %c0_31] : memref<16x128xf32, #tpu.memory_space<vmem>>, vector<1x128xf32>
    %c8_i32_32 = arith.constant 8 : i32
    %101 = arith.addi %c8_i32_32, %c3_i32 : i32
    %102 = arith.index_cast %101 : i32 to index
    %c0_33 = arith.constant 0 : index
    %103 = vector.load %arg7[%102, %c0_33] : memref<16x128xf32, #tpu.memory_space<vmem>>, vector<1x128xf32>
    %104 = tpu.concatenate %100, %103 in 0 : vector<1x128xf32>, vector<1x128xf32> -> vector<2x128xf32>
    %cst_34 = arith.constant dense<0.000000e+00> : vector<2x128xf32>
    %105 = tpu.matmul %97, %23, %cst_34 {dimension_numbers = #tpu.dot_dimension_numbers<[1], [0], [0], [1], [0, 0, 1, 1], [], []>} : vector<2x32xf32>, vector<32x128xf32>, vector<2x128xf32> -> vector<2x128xf32>
    %106 = arith.addf %104, %105 : vector<2x128xf32>
    %107 = arith.negf %106 : vector<2x128xf32>
    %108 = math.exp %107 : vector<2x128xf32>
    %cst_35 = arith.constant 1.000000e+00 : f32
    %109 = vector.broadcast %cst_35 : f32 to vector<2x128xf32>
    %110 = arith.addf %109, %108 : vector<2x128xf32>
    %111 = arith.divf %109, %110 : vector<2x128xf32>
    %112 = vector.extract_strided_slice %111 {offsets = [0, 0], sizes = [2, 32], strides = [1, 1]} : vector<2x128xf32> to vector<2x32xf32>
    %113 = vector.extract_strided_slice %111 {offsets = [0, 32], sizes = [2, 32], strides = [1, 1]} : vector<2x128xf32> to vector<2x32xf32>
    %114 = vector.extract_strided_slice %111 {offsets = [0, 96], sizes = [2, 32], strides = [1, 1]} : vector<2x128xf32> to vector<2x32xf32>
    %115 = vector.extract_strided_slice %106 {offsets = [0, 64], sizes = [2, 32], strides = [1, 1]} : vector<2x128xf32> to vector<2x32xf32>
    %116 = math.tanh %115 : vector<2x32xf32>
    %117 = arith.mulf %113, %95 : vector<2x32xf32>
    %118 = arith.mulf %112, %116 : vector<2x32xf32>
    %119 = arith.addf %117, %118 : vector<2x32xf32>
    %120 = math.tanh %119 : vector<2x32xf32>
    %121 = arith.mulf %114, %120 : vector<2x32xf32>
    %c4_i32 = arith.constant 4 : i32
    %c0_i32_36 = arith.constant 0 : i32
    %122 = arith.addi %c0_i32_36, %c4_i32 : i32
    %123 = arith.index_cast %122 : i32 to index
    %c0_37 = arith.constant 0 : index
    %124 = vector.load %arg7[%123, %c0_37] : memref<16x128xf32, #tpu.memory_space<vmem>>, vector<1x128xf32>
    %c8_i32_38 = arith.constant 8 : i32
    %125 = arith.addi %c8_i32_38, %c4_i32 : i32
    %126 = arith.index_cast %125 : i32 to index
    %c0_39 = arith.constant 0 : index
    %127 = vector.load %arg7[%126, %c0_39] : memref<16x128xf32, #tpu.memory_space<vmem>>, vector<1x128xf32>
    %128 = tpu.concatenate %124, %127 in 0 : vector<1x128xf32>, vector<1x128xf32> -> vector<2x128xf32>
    %cst_40 = arith.constant dense<0.000000e+00> : vector<2x128xf32>
    %129 = tpu.matmul %121, %23, %cst_40 {dimension_numbers = #tpu.dot_dimension_numbers<[1], [0], [0], [1], [0, 0, 1, 1], [], []>} : vector<2x32xf32>, vector<32x128xf32>, vector<2x128xf32> -> vector<2x128xf32>
    %130 = arith.addf %128, %129 : vector<2x128xf32>
    %131 = arith.negf %130 : vector<2x128xf32>
    %132 = math.exp %131 : vector<2x128xf32>
    %cst_41 = arith.constant 1.000000e+00 : f32
    %133 = vector.broadcast %cst_41 : f32 to vector<2x128xf32>
    %134 = arith.addf %133, %132 : vector<2x128xf32>
    %135 = arith.divf %133, %134 : vector<2x128xf32>
    %136 = vector.extract_strided_slice %135 {offsets = [0, 0], sizes = [2, 32], strides = [1, 1]} : vector<2x128xf32> to vector<2x32xf32>
    %137 = vector.extract_strided_slice %135 {offsets = [0, 32], sizes = [2, 32], strides = [1, 1]} : vector<2x128xf32> to vector<2x32xf32>
    %138 = vector.extract_strided_slice %135 {offsets = [0, 96], sizes = [2, 32], strides = [1, 1]} : vector<2x128xf32> to vector<2x32xf32>
    %139 = vector.extract_strided_slice %130 {offsets = [0, 64], sizes = [2, 32], strides = [1, 1]} : vector<2x128xf32> to vector<2x32xf32>
    %140 = math.tanh %139 : vector<2x32xf32>
    %141 = arith.mulf %137, %119 : vector<2x32xf32>
    %142 = arith.mulf %136, %140 : vector<2x32xf32>
    %143 = arith.addf %141, %142 : vector<2x32xf32>
    %144 = math.tanh %143 : vector<2x32xf32>
    %145 = arith.mulf %138, %144 : vector<2x32xf32>
    %c5_i32 = arith.constant 5 : i32
    %c0_i32_42 = arith.constant 0 : i32
    %146 = arith.addi %c0_i32_42, %c5_i32 : i32
    %147 = arith.index_cast %146 : i32 to index
    %c0_43 = arith.constant 0 : index
    %148 = vector.load %arg7[%147, %c0_43] : memref<16x128xf32, #tpu.memory_space<vmem>>, vector<1x128xf32>
    %c8_i32_44 = arith.constant 8 : i32
    %149 = arith.addi %c8_i32_44, %c5_i32 : i32
    %150 = arith.index_cast %149 : i32 to index
    %c0_45 = arith.constant 0 : index
    %151 = vector.load %arg7[%150, %c0_45] : memref<16x128xf32, #tpu.memory_space<vmem>>, vector<1x128xf32>
    %152 = tpu.concatenate %148, %151 in 0 : vector<1x128xf32>, vector<1x128xf32> -> vector<2x128xf32>
    %cst_46 = arith.constant dense<0.000000e+00> : vector<2x128xf32>
    %153 = tpu.matmul %145, %23, %cst_46 {dimension_numbers = #tpu.dot_dimension_numbers<[1], [0], [0], [1], [0, 0, 1, 1], [], []>} : vector<2x32xf32>, vector<32x128xf32>, vector<2x128xf32> -> vector<2x128xf32>
    %154 = arith.addf %152, %153 : vector<2x128xf32>
    %155 = arith.negf %154 : vector<2x128xf32>
    %156 = math.exp %155 : vector<2x128xf32>
    %cst_47 = arith.constant 1.000000e+00 : f32
    %157 = vector.broadcast %cst_47 : f32 to vector<2x128xf32>
    %158 = arith.addf %157, %156 : vector<2x128xf32>
    %159 = arith.divf %157, %158 : vector<2x128xf32>
    %160 = vector.extract_strided_slice %159 {offsets = [0, 0], sizes = [2, 32], strides = [1, 1]} : vector<2x128xf32> to vector<2x32xf32>
    %161 = vector.extract_strided_slice %159 {offsets = [0, 32], sizes = [2, 32], strides = [1, 1]} : vector<2x128xf32> to vector<2x32xf32>
    %162 = vector.extract_strided_slice %159 {offsets = [0, 96], sizes = [2, 32], strides = [1, 1]} : vector<2x128xf32> to vector<2x32xf32>
    %163 = vector.extract_strided_slice %154 {offsets = [0, 64], sizes = [2, 32], strides = [1, 1]} : vector<2x128xf32> to vector<2x32xf32>
    %164 = math.tanh %163 : vector<2x32xf32>
    %165 = arith.mulf %161, %143 : vector<2x32xf32>
    %166 = arith.mulf %160, %164 : vector<2x32xf32>
    %167 = arith.addf %165, %166 : vector<2x32xf32>
    %168 = math.tanh %167 : vector<2x32xf32>
    %169 = arith.mulf %162, %168 : vector<2x32xf32>
    %c6_i32 = arith.constant 6 : i32
    %c0_i32_48 = arith.constant 0 : i32
    %170 = arith.addi %c0_i32_48, %c6_i32 : i32
    %171 = arith.index_cast %170 : i32 to index
    %c0_49 = arith.constant 0 : index
    %172 = vector.load %arg7[%171, %c0_49] : memref<16x128xf32, #tpu.memory_space<vmem>>, vector<1x128xf32>
    %c8_i32_50 = arith.constant 8 : i32
    %173 = arith.addi %c8_i32_50, %c6_i32 : i32
    %174 = arith.index_cast %173 : i32 to index
    %c0_51 = arith.constant 0 : index
    %175 = vector.load %arg7[%174, %c0_51] : memref<16x128xf32, #tpu.memory_space<vmem>>, vector<1x128xf32>
    %176 = tpu.concatenate %172, %175 in 0 : vector<1x128xf32>, vector<1x128xf32> -> vector<2x128xf32>
    %cst_52 = arith.constant dense<0.000000e+00> : vector<2x128xf32>
    %177 = tpu.matmul %169, %23, %cst_52 {dimension_numbers = #tpu.dot_dimension_numbers<[1], [0], [0], [1], [0, 0, 1, 1], [], []>} : vector<2x32xf32>, vector<32x128xf32>, vector<2x128xf32> -> vector<2x128xf32>
    %178 = arith.addf %176, %177 : vector<2x128xf32>
    %179 = arith.negf %178 : vector<2x128xf32>
    %180 = math.exp %179 : vector<2x128xf32>
    %cst_53 = arith.constant 1.000000e+00 : f32
    %181 = vector.broadcast %cst_53 : f32 to vector<2x128xf32>
    %182 = arith.addf %181, %180 : vector<2x128xf32>
    %183 = arith.divf %181, %182 : vector<2x128xf32>
    %184 = vector.extract_strided_slice %183 {offsets = [0, 0], sizes = [2, 32], strides = [1, 1]} : vector<2x128xf32> to vector<2x32xf32>
    %185 = vector.extract_strided_slice %183 {offsets = [0, 32], sizes = [2, 32], strides = [1, 1]} : vector<2x128xf32> to vector<2x32xf32>
    %186 = vector.extract_strided_slice %183 {offsets = [0, 96], sizes = [2, 32], strides = [1, 1]} : vector<2x128xf32> to vector<2x32xf32>
    %187 = vector.extract_strided_slice %178 {offsets = [0, 64], sizes = [2, 32], strides = [1, 1]} : vector<2x128xf32> to vector<2x32xf32>
    %188 = math.tanh %187 : vector<2x32xf32>
    %189 = arith.mulf %185, %167 : vector<2x32xf32>
    %190 = arith.mulf %184, %188 : vector<2x32xf32>
    %191 = arith.addf %189, %190 : vector<2x32xf32>
    %192 = math.tanh %191 : vector<2x32xf32>
    %193 = arith.mulf %186, %192 : vector<2x32xf32>
    %c7_i32 = arith.constant 7 : i32
    %c0_i32_54 = arith.constant 0 : i32
    %194 = arith.addi %c0_i32_54, %c7_i32 : i32
    %195 = arith.index_cast %194 : i32 to index
    %c0_55 = arith.constant 0 : index
    %196 = vector.load %arg7[%195, %c0_55] : memref<16x128xf32, #tpu.memory_space<vmem>>, vector<1x128xf32>
    %c8_i32_56 = arith.constant 8 : i32
    %197 = arith.addi %c8_i32_56, %c7_i32 : i32
    %198 = arith.index_cast %197 : i32 to index
    %c0_57 = arith.constant 0 : index
    %199 = vector.load %arg7[%198, %c0_57] : memref<16x128xf32, #tpu.memory_space<vmem>>, vector<1x128xf32>
    %200 = tpu.concatenate %196, %199 in 0 : vector<1x128xf32>, vector<1x128xf32> -> vector<2x128xf32>
    %cst_58 = arith.constant dense<0.000000e+00> : vector<2x128xf32>
    %201 = tpu.matmul %193, %23, %cst_58 {dimension_numbers = #tpu.dot_dimension_numbers<[1], [0], [0], [1], [0, 0, 1, 1], [], []>} : vector<2x32xf32>, vector<32x128xf32>, vector<2x128xf32> -> vector<2x128xf32>
    %202 = arith.addf %200, %201 : vector<2x128xf32>
    %203 = arith.negf %202 : vector<2x128xf32>
    %204 = math.exp %203 : vector<2x128xf32>
    %cst_59 = arith.constant 1.000000e+00 : f32
    %205 = vector.broadcast %cst_59 : f32 to vector<2x128xf32>
    %206 = arith.addf %205, %204 : vector<2x128xf32>
    %207 = arith.divf %205, %206 : vector<2x128xf32>
    %208 = vector.extract_strided_slice %207 {offsets = [0, 0], sizes = [2, 32], strides = [1, 1]} : vector<2x128xf32> to vector<2x32xf32>
    %209 = vector.extract_strided_slice %207 {offsets = [0, 32], sizes = [2, 32], strides = [1, 1]} : vector<2x128xf32> to vector<2x32xf32>
    %210 = vector.extract_strided_slice %207 {offsets = [0, 96], sizes = [2, 32], strides = [1, 1]} : vector<2x128xf32> to vector<2x32xf32>
    %211 = vector.extract_strided_slice %202 {offsets = [0, 64], sizes = [2, 32], strides = [1, 1]} : vector<2x128xf32> to vector<2x32xf32>
    %212 = math.tanh %211 : vector<2x32xf32>
    %213 = arith.mulf %209, %191 : vector<2x32xf32>
    %214 = arith.mulf %208, %212 : vector<2x32xf32>
    %215 = arith.addf %213, %214 : vector<2x32xf32>
    %216 = math.tanh %215 : vector<2x32xf32>
    %217 = arith.mulf %210, %216 : vector<2x32xf32>
    %c8_i32_60 = arith.constant 8 : i32
    %c0_61 = arith.constant 0 : index
    %c0_62 = arith.constant 0 : index
    %218 = vector.load %arg4[%c0_61, %c0_62] : memref<32x128xf32, #tpu.memory_space<vmem>>, vector<32x128xf32>
    %cst_63 = arith.constant dense<0.000000e+00> : vector<2x128xf32>
    %219 = tpu.matmul %217, %218, %cst_63 {dimension_numbers = #tpu.dot_dimension_numbers<[1], [0], [0], [1], [0, 0, 1, 1], [], []>} : vector<2x32xf32>, vector<32x128xf32>, vector<2x128xf32> -> vector<2x128xf32>
    %c0_64 = arith.constant 0 : index
    %c0_65 = arith.constant 0 : index
    %220 = vector.load %arg5[%c0_64, %c0_65] : memref<1x128xf32, #tpu.memory_space<vmem>>, vector<1x128xf32>
    %221 = vector.broadcast %220 : vector<1x128xf32> to vector<2x128xf32>
    %222 = arith.addf %219, %221 : vector<2x128xf32>
    %c0_66 = arith.constant 0 : index
    %c0_67 = arith.constant 0 : index
    %223 = vector.load %arg6[%c0_66, %c0_67] : memref<2x128xf32, #tpu.memory_space<vmem>>, vector<2x128xf32>
    tpu.vector_store %arg6[%c0_66, %c0_67], %222 {strides = array<i32>} : memref<2x128xf32, #tpu.memory_space<vmem>>, vector<2x128xf32>,
    return
  }
}

</mosaic_0001>

<llo_original>
// kernel: lstm_model_forward.1
$region0: #{lstm_model_forward.1}
  #allocation0 [shape = 'u32[]', space=smem, size = 0x4, offset = 0x4, fixed_abs, tag = 'smem constant byte address 0x4 - core index']
  #allocation1 [shape = 'u32[144,128]{1,0:T(1,128)}', space=vmem, size = 0x12000, scoped, tag = 'internal scratch']
  #allocation2 [shape = 'f32[16,128]{1,0:T(8,128)}', space=vmem, size = 0x2000, scoped, tag = 'scratch operand']
  %s0 = inlined_call_operand.vmem [shape: f32[2,8,3], index: 0, kind: input, shape index: {}]
  %s1 = inlined_call_operand.vmem [shape: f32[3,128], index: 1, kind: input, shape index: {}]
  %s2 = inlined_call_operand.vmem [shape: f32[1,128], index: 2, kind: input, shape index: {}]
  %s3 = inlined_call_operand.vmem [shape: f32[32,128], index: 3, kind: input, shape index: {}]
  %s4 = inlined_call_operand.hbm [shape: f32[32,128], index: 4, kind: input, shape index: {}]
  %s5 = inlined_call_operand.hbm [shape: f32[1,128], index: 5, kind: input, shape index: {}]
  %s6 = inlined_call_operand.hbm [shape: f32[2,128], index: 6, kind: output, shape index: {}]
  %s7 = sld [smem:[#allocation0]]
  $region42: #{lstm_model_forward.1} parent=0
    _
  %s9 = ssub.s32 1, %s7
  %s10 = scalar_select 0, %s9, %s7
  $region1: #{lstm_model_forward.1} parent=0
    #allocation3 [shape = 'u8[16384]{0}', space=vmem, size = 0x4000, scoped, tag = 'input window, operand 4, single buffered']
    #allocation4 [shape = 's32[1]{0}', space=sflag, size = 0x4, scoped, tag = 'scoped memory for lstm_model_forward.1']
    #allocation5 [shape = 's32[1]{0}', space=sflag, size = 0x4, scoped, tag = 'scoped memory for lstm_model_forward.1']
    #allocation6 [shape = 'u8[512]{0}', space=vmem, size = 0x400, scoped, tag = 'input window, operand 5, single buffered']
    #allocation7 [shape = 's32[1]{0}', space=sflag, size = 0x4, scoped, tag = 'scoped memory for lstm_model_forward.1']
    #allocation8 [shape = 'u8[1024]{0}', space=vmem, size = 0x400, scoped, tag = 'output window, operand 0, single buffered']
    %11 = vsyncpa [#allocation4], 0
    %12 = vsyncpa [#allocation7], 0
    %13 = vsyncpa [#allocation5], 0
    // Predicated region
    $region2: #{lstm_model_forward.1} parent=1 // pred_check
      _
    $region3: #{lstm_model_forward.1} parent=1 // pred_check_branch
      %15 = sbr.rel (0) target = $region5
    $region4: #{lstm_model_forward.1} parent=1 // pred_region
      _
    $region5: #{lstm_model_forward.1} parent=1 // pred_fallthru
      _
    // Predicated region
    $region6: #{lstm_model_forward.1} parent=1 // pred_check
      _
    $region7: #{lstm_model_forward.1} parent=1 // pred_check_branch
      %17 = sbr.rel (0) target = $region9
    $region8: #{lstm_model_forward.1} parent=1 // pred_region
      _
    $region9: #{lstm_model_forward.1} parent=1 // pred_fallthru
      _
    // Predicated region
    $region10: #{lstm_model_forward.1} parent=1 // pred_check
      _
    $region11: #{lstm_model_forward.1} parent=1 // pred_check_branch
      %19 = sbr.rel (0) target = $region13
    $region12: #{lstm_model_forward.1} parent=1 // pred_region
      _
    $region13: #{lstm_model_forward.1} parent=1 // pred_fallthru
      _
    // Predicated region
    $region14: #{lstm_model_forward.1} parent=1 // pred_check
      _
    $region15: #{lstm_model_forward.1} parent=1 // pred_check_branch
      %21 = sbr.rel (0) target = $region17
    $region16: #{lstm_model_forward.1} parent=1 // pred_region
      _
    $region17: #{lstm_model_forward.1} parent=1 // pred_fallthru
      _
    // Predicated region
    $region18: #{lstm_model_forward.1} parent=1 // pred_check
      _
    $region19: #{lstm_model_forward.1} parent=1 // pred_check_branch
      %23 = sbr.rel (0) target = $region21
    $region20: #{lstm_model_forward.1} parent=1 // pred_region
      %s25 = ssub.s32 512, 512
      %26 = vsyncadd [#allocation4], %s25
      %s27 = sshll.u32 [#allocation3], 4
      %s28 = int_to_ptr.vmem [resolvable:$true] %s27
      %33 = dma.hbm_to_vmem [thread:$0]  %s4, 512, %s28, [#allocation4], 128, 128, 8
    $region21: #{lstm_model_forward.1} parent=1 // pred_fallthru
      _
    // Predicated region
    $region22: #{lstm_model_forward.1} parent=1 // pred_check
      _
    $region23: #{lstm_model_forward.1} parent=1 // pred_check_branch
      %35 = sbr.rel (0) target = $region25
    $region24: #{lstm_model_forward.1} parent=1 // pred_region
      %s37 = ssub.s32 16, 16
      %38 = vsyncadd [#allocation7], %s37
      %s40 = sshll.u32 [#allocation6], 4
      %s41 = int_to_ptr.vmem [resolvable:$true] %s40
      %43 = dma.hbm_to_vmem [thread:$0]  %s5, 16, %s41, [#allocation7]
    $region25: #{lstm_model_forward.1} parent=1 // pred_fallthru
      _
    // Predicated region
    $region26: #{lstm_model_forward.1} parent=1 // pred_check
      _
    $region27: #{lstm_model_forward.1} parent=1 // pred_check_branch
      %45 = sbr.rel (0) target = $region29
    $region28: #{lstm_model_forward.1} parent=1 // pred_region
      %46 = dma.done [#allocation4], 512
    $region29: #{lstm_model_forward.1} parent=1 // pred_fallthru
      _
    // Predicated region
    $region30: #{lstm_model_forward.1} parent=1 // pred_check
      _
    $region31: #{lstm_model_forward.1} parent=1 // pred_check_branch
      %48 = sbr.rel (0) target = $region33
    $region32: #{lstm_model_forward.1} parent=1 // pred_region
      %49 = dma.done [#allocation7], 16
    $region33: #{lstm_model_forward.1} parent=1 // pred_fallthru
      _
    %v50 = vld [vmem:[%s0] sm:$0xff]
    %v51 = vld [vmem:[%s0 + $0x8] sm:$0xff]
    %v52 = vld [vmem:[%s2] sm:$0x1]
    %v53 = vld [vmem:[%s1] sm:$0x1]
    %55 = vset.pattern.permute.xlu0 0
    %56 = vperm.xlu0 %55, %v50
    %v57 = vpop.permute.xlu0 %56
    %60 = vset.pattern.permute.xlu0 0
    %61 = vperm.xlu0 %60, %v51
    %v62 = vpop.permute.xlu0 %61
    %v64 = vlaneseq
    %v65 = vshrl.u32 %v64, 7
    %v66 = vsub.s32 0, %v65
    %v67 = vrot.slane %v53, %v66
    %v68 = vmul.f32 %v57, %v67
    %v69 = vmul.f32 %v62, %v67
    %v71 = vlaneseq
    %v72 = vshrl.u32 %v71, 7
    %v73 = vsub.s32 0, %v72
    %v74 = vrot.slane %v52, %v73
    %v76 = vadd.f32 %v74, %v68
    %v77 = vadd.f32 %v74, %v69
    %v78 = vld [vmem:[%s1 + $0x1] sm:$0x1]
    %79 = vset.pattern.permute.xlu0 1
    %80 = vperm.xlu0 %79, %v50
    %v81 = vpop.permute.xlu0 %80
    %83 = vset.pattern.permute.xlu0 1
    %84 = vperm.xlu0 %83, %v51
    %v85 = vpop.permute.xlu0 %84
    %v87 = vlaneseq
    %v88 = vshrl.u32 %v87, 7
    %v89 = vsub.s32 0, %v88
    %v90 = vrot.slane %v78, %v89
    %v91 = vmul.f32 %v81, %v90
    %v92 = vmul.f32 %v85, %v90
    %v93 = vadd.f32 %v76, %v91
    %v94 = vadd.f32 %v77, %v92
    %v95 = vld [vmem:[%s1 + $0x2] sm:$0x1]
    %96 = vset.pattern.permute.xlu0 2
    %97 = vperm.xlu0 %96, %v50
    %v98 = vpop.permute.xlu0 %97
    %100 = vset.pattern.permute.xlu0 2
    %101 = vperm.xlu0 %100, %v51
    %v102 = vpop.permute.xlu0 %101
    %v104 = vlaneseq
    %v105 = vshrl.u32 %v104, 7
    %v106 = vsub.s32 0, %v105
    %v107 = vrot.slane %v95, %v106
    %v108 = vmul.f32 %v98, %v107
    %v109 = vmul.f32 %v102, %v107
    %v110 = vadd.f32 %v93, %v108
    %v111 = vadd.f32 %v94, %v109
    %112 = vst [vmem:[#allocation2] sm:$0xff] %v110
    %113 = vst [vmem:[#allocation2 + $0x8] sm:$0xff] %v111
    %v114 = vld [vmem:[%s3] sm:$0xff]
    %v115 = vld [vmem:[%s3 + $0x8] sm:$0xff]
    %v116 = vld [vmem:[%s3 + $0x10] sm:$0xff]
    %v117 = vld [vmem:[%s3 + $0x18] sm:$0xff]
    %v118 = vld [vmem:[#allocation2] sm:$0x1]
    %v119 = vld [vmem:[#allocation2 + $0x8] sm:$0x1]
    %v121 = vrot.slane %v119, 7
    %vm123 = vcmask 1040384
    %v124 = vsel %vm123, %v118, %v121
    %vm125 = vcmask 261120
    %v127 = vsel %vm125, 0.0, 0
    %129 = vmatprep.subr.mxu0 0.0
    %130 = vmatpush1.msra.mxu0 %v114
    %131 = vmatprep.subr.mxu0 0.0
    %132 = vmatpush1.msra.mxu0 %v115
    %133 = vmatprep.subr.mxu0 0.0
    %134 = vmatpush1.msra.mxu0 %v116
    %135 = vmatprep.subr.mxu0 0.0
    %136 = vmatpush1.msra.mxu0 %v117
    %137 = vmatprep.subr.mxu0 0.0
    %138 = vmatpush1.msra.mxu0 0.0
    %139 = vmatprep.subr.mxu0 0.0
    %140 = vmatpush1.msra.mxu0 0.0
    %141 = vmatprep.subr.mxu0 0.0
    %142 = vmatpush1.msra.mxu0 0.0
    %143 = vmatprep.subr.mxu0 0.0
    %144 = vmatpush1.msra.mxu0 0.0
    %145 = vmatprep.subr.mxu0 0.0
    %146 = vmatpush1.msra.mxu0 0.0
    %147 = vmatprep.subr.mxu0 0.0
    %148 = vmatpush1.msra.mxu0 0.0
    %149 = vmatprep.subr.mxu0 0.0
    %150 = vmatpush1.msra.mxu0 0.0
    %151 = vmatprep.subr.mxu0 0.0
    %152 = vmatpush1.msra.mxu0 0.0
    %153 = vmatprep.subr.mxu0 0.0
    %154 = vmatpush1.msra.mxu0 0.0
    %155 = vmatprep.subr.mxu0 0.0
    %156 = vmatpush1.msra.mxu0 0.0
    %157 = vmatprep.subr.mxu0 0.0
    %158 = vmatpush1.msra.mxu0 0.0
    %159 = vmatprep.subr.mxu0 0.0
    %160 = vmatpush1.msra.mxu0 0.0
    %161 = vmatprep.subr.mxu0 0.0
    %162 = vmatpush1.msra.mxu0 0.0
    %163 = vmatprep.subr.mxu0 0.0
    %164 = vmatpush1.msra.mxu0 0.0
    %165 = vmatprep.subr.mxu0 0.0
    %166 = vmatpush1.msra.mxu0 0.0
    %167 = vmatprep.subr.mxu0 0.0
    %168 = vmatpush1.msra.mxu0 0.0
    %169 = vmatprep.subr.mxu0 0.0
    %170 = vmatpush1.msra.mxu0 0.0
    %171 = vmatprep.subr.mxu0 0.0
    %172 = vmatpush1.msra.mxu0 0.0
    %173 = vmatprep.subr.mxu0 0.0
    %174 = vmatpush1.msra.mxu0 0.0
    %175 = vmatprep.subr.mxu0 0.0
    %176 = vmatpush1.msra.mxu0 0.0
    %177 = vmatprep.subr.mxu0 0.0
    %178 = vmatpush1.msra.mxu0 0.0
    %179 = vmatprep.subr.mxu0 0.0
    %180 = vmatpush1.msra.mxu0 0.0
    %181 = vmatprep.subr.mxu0 0.0
    %182 = vmatpush1.msra.mxu0 0.0
    %183 = vmatprep.subr.mxu0 0.0
    %184 = vmatpush1.msra.mxu0 0.0
    %185 = vmatprep.subr.mxu0 0.0
    %186 = vmatpush1.msra.mxu0 0.0
    %187 = vmatprep.subr.mxu0 0.0
    %188 = vmatpush1.msra.mxu0 0.0
    %189 = vmatprep.subr.mxu0 0.0
    %190 = vmatpush1.msra.mxu0 0.0
    %191 = vmatprep.subr.mxu0 0.0
    %192 = vmatpush1.msra.mxu0 0.0
    %193 = vmatprep.mubr.f32.mxu0 0.0
    %194 = vmatmul.mubr.f32.gmra.mrb[0].mxu0 %v127
    %v195 = vpop.f32.mrb[0].mxu0
    %v196 = vadd.f32 0.0, %v195
    %v197 = vpop.f32.mrb[0].mxu0
    %198 = vdwg.mxu0
    %v199 = vadd.f32 %v124, %v196
    %v200 = vxor.u32 %v199, 2147483648
    %v201 = vmul.f32 %v200, 1.442695
    %v202 = vpow.pop %v201
    %v203 = vadd.f32 %v202, 1.0
    %v204 = vrcp.pop %v203
    %v205 = vmul.f32 1.0, %v204
    %v206 = vtanh.pop %v199
    %v207 = vmul.f32 %v205, 0.0
    %209 = vrot.lane.b32.xlu0 %v206, 64
    %v210 = vpop.permute.xlu0 %209
    %v212 = vmul.f32 %v205, %v210
    %214 = vrot.lane.b32.xlu0 %v212, 32
    %v215 = vpop.permute.xlu0 %214
    %v217 = vadd.f32 %v207, %v215
    %v218 = vtanh.pop %v217
    %220 = vrot.lane.b32.xlu0 %v218, 64
    %v221 = vpop.permute.xlu0 %220
    %v223 = vmul.f32 %v205, %v221
    %v224 = vld [vmem:[#allocation2 + $0x1] sm:$0x1]
    %v225 = vld [vmem:[#allocation2 + $0x9] sm:$0x1]
    %v227 = vrot.slane %v225, 7
    %v229 = vsel %vm123, %v224, %v227
    %231 = vrot.lane.b32.xlu0 %v223, 32
    %v232 = vpop.permute.xlu0 %231
    %v233 = vsel %vm125, %v232, 0
    %235 = vmatprep.subr.mxu0 0.0
    %236 = vmatpush1.msra.mxu0 %v114
    %237 = vmatprep.subr.mxu0 0.0
    %238 = vmatpush1.msra.mxu0 %v115
    %239 = vmatprep.subr.mxu0 0.0
    %240 = vmatpush1.msra.mxu0 %v116
    %241 = vmatprep.subr.mxu0 0.0
    %242 = vmatpush1.msra.mxu0 %v117
    %243 = vmatprep.subr.mxu0 0.0
    %244 = vmatpush1.msra.mxu0 0.0
    %245 = vmatprep.subr.mxu0 0.0
    %246 = vmatpush1.msra.mxu0 0.0
    %247 = vmatprep.subr.mxu0 0.0
    %248 = vmatpush1.msra.mxu0 0.0
    %249 = vmatprep.subr.mxu0 0.0
    %250 = vmatpush1.msra.mxu0 0.0
    %251 = vmatprep.subr.mxu0 0.0
    %252 = vmatpush1.msra.mxu0 0.0
    %253 = vmatprep.subr.mxu0 0.0
    %254 = vmatpush1.msra.mxu0 0.0
    %255 = vmatprep.subr.mxu0 0.0
    %256 = vmatpush1.msra.mxu0 0.0
    %257 = vmatprep.subr.mxu0 0.0
    %258 = vmatpush1.msra.mxu0 0.0
    %259 = vmatprep.subr.mxu0 0.0
    %260 = vmatpush1.msra.mxu0 0.0
    %261 = vmatprep.subr.mxu0 0.0
    %262 = vmatpush1.msra.mxu0 0.0
    %263 = vmatprep.subr.mxu0 0.0
    %264 = vmatpush1.msra.mxu0 0.0
    %265 = vmatprep.subr.mxu0 0.0
    %266 = vmatpush1.msra.mxu0 0.0
    %267 = vmatprep.subr.mxu0 0.0
    %268 = vmatpush1.msra.mxu0 0.0
    %269 = vmatprep.subr.mxu0 0.0
    %270 = vmatpush1.msra.mxu0 0.0
    %271 = vmatprep.subr.mxu0 0.0
    %272 = vmatpush1.msra.mxu0 0.0
    %273 = vmatprep.subr.mxu0 0.0
    %274 = vmatpush1.msra.mxu0 0.0
    %275 = vmatprep.subr.mxu0 0.0
    %276 = vmatpush1.msra.mxu0 0.0
    %277 = vmatprep.subr.mxu0 0.0
    %278 = vmatpush1.msra.mxu0 0.0
    %279 = vmatprep.subr.mxu0 0.0
    %280 = vmatpush1.msra.mxu0 0.0
    %281 = vmatprep.subr.mxu0 0.0
    %282 = vmatpush1.msra.mxu0 0.0
    %283 = vmatprep.subr.mxu0 0.0
    %284 = vmatpush1.msra.mxu0 0.0
    %285 = vmatprep.subr.mxu0 0.0
    %286 = vmatpush1.msra.mxu0 0.0
    %287 = vmatprep.subr.mxu0 0.0
    %288 = vmatpush1.msra.mxu0 0.0
    %289 = vmatprep.subr.mxu0 0.0
    %290 = vmatpush1.msra.mxu0 0.0
    %291 = vmatprep.subr.mxu0 0.0
    %292 = vmatpush1.msra.mxu0 0.0
    %293 = vmatprep.subr.mxu0 0.0
    %294 = vmatpush1.msra.mxu0 0.0
    %295 = vmatprep.subr.mxu0 0.0
    %296 = vmatpush1.msra.mxu0 0.0
    %297 = vmatprep.subr.mxu0 0.0
    %298 = vmatpush1.msra.mxu0 0.0
    %299 = vmatprep.mubr.f32.mxu0 0.0
    %300 = vmatmul.mubr.f32.gmra.mrb[0].mxu0 %v233
    %v301 = vpop.f32.mrb[0].mxu0
    %v302 = vadd.f32 0.0, %v301
    %v303 = vpop.f32.mrb[0].mxu0
    %304 = vdwg.mxu0
    %v305 = vadd.f32 %v229, %v302
    %v306 = vxor.u32 %v305, 2147483648
    %v307 = vmul.f32 %v306, 1.442695
    %v308 = vpow.pop %v307
    %v309 = vadd.f32 %v308, 1.0
    %v310 = vrcp.pop %v309
    %v311 = vmul.f32 1.0, %v310
    %v312 = vtanh.pop %v305
    %v313 = vmul.f32 %v311, %v217
    %315 = vrot.lane.b32.xlu0 %v312, 64
    %v316 = vpop.permute.xlu0 %315
    %v318 = vmul.f32 %v311, %v316
    %320 = vrot.lane.b32.xlu0 %v318, 32
    %v321 = vpop.permute.xlu0 %320
    %v323 = vadd.f32 %v313, %v321
    %v324 = vtanh.pop %v323
    %326 = vrot.lane.b32.xlu0 %v324, 64
    %v327 = vpop.permute.xlu0 %326
    %v329 = vmul.f32 %v311, %v327
    %v330 = vld [vmem:[#allocation2 + $0x2] sm:$0x1]
    %v331 = vld [vmem:[#allocation2 + $0xa] sm:$0x1]
    %v333 = vrot.slane %v331, 7
    %v335 = vsel %vm123, %v330, %v333
    %337 = vrot.lane.b32.xlu0 %v329, 32
    %v338 = vpop.permute.xlu0 %337
    %v339 = vsel %vm125, %v338, 0
    %341 = vmatprep.subr.mxu0 0.0
    %342 = vmatpush1.msra.mxu0 %v114
    %343 = vmatprep.subr.mxu0 0.0
    %344 = vmatpush1.msra.mxu0 %v115
    %345 = vmatprep.subr.mxu0 0.0
    %346 = vmatpush1.msra.mxu0 %v116
    %347 = vmatprep.subr.mxu0 0.0
    %348 = vmatpush1.msra.mxu0 %v117
    %349 = vmatprep.subr.mxu0 0.0
    %350 = vmatpush1.msra.mxu0 0.0
    %351 = vmatprep.subr.mxu0 0.0
    %352 = vmatpush1.msra.mxu0 0.0
    %353 = vmatprep.subr.mxu0 0.0
    %354 = vmatpush1.msra.mxu0 0.0
    %355 = vmatprep.subr.mxu0 0.0
    %356 = vmatpush1.msra.mxu0 0.0
    %357 = vmatprep.subr.mxu0 0.0
    %358 = vmatpush1.msra.mxu0 0.0
    %359 = vmatprep.subr.mxu0 0.0
    %360 = vmatpush1.msra.mxu0 0.0
    %361 = vmatprep.subr.mxu0 0.0
    %362 = vmatpush1.msra.mxu0 0.0
    %363 = vmatprep.subr.mxu0 0.0
    %364 = vmatpush1.msra.mxu0 0.0
    %365 = vmatprep.subr.mxu0 0.0
    %366 = vmatpush1.msra.mxu0 0.0
    %367 = vmatprep.subr.mxu0 0.0
    %368 = vmatpush1.msra.mxu0 0.0
    %369 = vmatprep.subr.mxu0 0.0
    %370 = vmatpush1.msra.mxu0 0.0
    %371 = vmatprep.subr.mxu0 0.0
    %372 = vmatpush1.msra.mxu0 0.0
    %373 = vmatprep.subr.mxu0 0.0
    %374 = vmatpush1.msra.mxu0 0.0
    %375 = vmatprep.subr.mxu0 0.0
    %376 = vmatpush1.msra.mxu0 0.0
    %377 = vmatprep.subr.mxu0 0.0
    %378 = vmatpush1.msra.mxu0 0.0
    %379 = vmatprep.subr.mxu0 0.0
    %380 = vmatpush1.msra.mxu0 0.0
    %381 = vmatprep.subr.mxu0 0.0
    %382 = vmatpush1.msra.mxu0 0.0
    %383 = vmatprep.subr.mxu0 0.0
    %384 = vmatpush1.msra.mxu0 0.0
    %385 = vmatprep.subr.mxu0 0.0
    %386 = vmatpush1.msra.mxu0 0.0
    %387 = vmatprep.subr.mxu0 0.0
    %388 = vmatpush1.msra.mxu0 0.0
    %389 = vmatprep.subr.mxu0 0.0
    %390 = vmatpush1.msra.mxu0 0.0
    %391 = vmatprep.subr.mxu0 0.0
    %392 = vmatpush1.msra.mxu0 0.0
    %393 = vmatprep.subr.mxu0 0.0
    %394 = vmatpush1.msra.mxu0 0.0
    %395 = vmatprep.subr.mxu0 0.0
    %396 = vmatpush1.msra.mxu0 0.0
    %397 = vmatprep.subr.mxu0 0.0
    %398 = vmatpush1.msra.mxu0 0.0
    %399 = vmatprep.subr.mxu0 0.0
    %400 = vmatpush1.msra.mxu0 0.0
    %401 = vmatprep.subr.mxu0 0.0
    %402 = vmatpush1.msra.mxu0 0.0
    %403 = vmatprep.subr.mxu0 0.0
    %404 = vmatpush1.msra.mxu0 0.0
    %405 = vmatprep.mubr.f32.mxu0 0.0
    %406 = vmatmul.mubr.f32.gmra.mrb[0].mxu0 %v339
    %v407 = vpop.f32.mrb[0].mxu0
    %v408 = vadd.f32 0.0, %v407
    %v409 = vpop.f32.mrb[0].mxu0
    %410 = vdwg.mxu0
    %v411 = vadd.f32 %v335, %v408
    %v412 = vxor.u32 %v411, 2147483648
    %v413 = vmul.f32 %v412, 1.442695
    %v414 = vpow.pop %v413
    %v415 = vadd.f32 %v414, 1.0
    %v416 = vrcp.pop %v415
    %v417 = vmul.f32 1.0, %v416
    %v418 = vtanh.pop %v411
    %v419 = vmul.f32 %v417, %v323
    %421 = vrot.lane.b32.xlu0 %v418, 64
    %v422 = vpop.permute.xlu0 %421
    %v424 = vmul.f32 %v417, %v422
    %426 = vrot.lane.b32.xlu0 %v424, 32
    %v427 = vpop.permute.xlu0 %426
    %v429 = vadd.f32 %v419, %v427
    %v430 = vtanh.pop %v429
    %432 = vrot.lane.b32.xlu0 %v430, 64
    %v433 = vpop.permute.xlu0 %432
    %v435 = vmul.f32 %v417, %v433
    %v436 = vld [vmem:[#allocation2 + $0x3] sm:$0x1]
    %v437 = vld [vmem:[#allocation2 + $0xb] sm:$0x1]
    %v439 = vrot.slane %v437, 7
    %v441 = vsel %vm123, %v436, %v439
    %443 = vrot.lane.b32.xlu0 %v435, 32
    %v444 = vpop.permute.xlu0 %443
    %v445 = vsel %vm125, %v444, 0
    %447 = vmatprep.subr.mxu0 0.0
    %448 = vmatpush1.msra.mxu0 %v114
    %449 = vmatprep.subr.mxu0 0.0
    %450 = vmatpush1.msra.mxu0 %v115
    %451 = vmatprep.subr.mxu0 0.0
    %452 = vmatpush1.msra.mxu0 %v116
    %453 = vmatprep.subr.mxu0 0.0
    %454 = vmatpush1.msra.mxu0 %v117
    %455 = vmatprep.subr.mxu0 0.0
    %456 = vmatpush1.msra.mxu0 0.0
    %457 = vmatprep.subr.mxu0 0.0
    %458 = vmatpush1.msra.mxu0 0.0
    %459 = vmatprep.subr.mxu0 0.0
    %460 = vmatpush1.msra.mxu0 0.0
    %461 = vmatprep.subr.mxu0 0.0
    %462 = vmatpush1.msra.mxu0 0.0
    %463 = vmatprep.subr.mxu0 0.0
    %464 = vmatpush1.msra.mxu0 0.0
    %465 = vmatprep.subr.mxu0 0.0
    %466 = vmatpush1.msra.mxu0 0.0
    %467 = vmatprep.subr.mxu0 0.0
    %468 = vmatpush1.msra.mxu0 0.0
    %469 = vmatprep.subr.mxu0 0.0
    %470 = vmatpush1.msra.mxu0 0.0
    %471 = vmatprep.subr.mxu0 0.0
    %472 = vmatpush1.msra.mxu0 0.0
    %473 = vmatprep.subr.mxu0 0.0
    %474 = vmatpush1.msra.mxu0 0.0
    %475 = vmatprep.subr.mxu0 0.0
    %476 = vmatpush1.msra.mxu0 0.0
    %477 = vmatprep.subr.mxu0 0.0
    %478 = vmatpush1.msra.mxu0 0.0
    %479 = vmatprep.subr.mxu0 0.0
    %480 = vmatpush1.msra.mxu0 0.0
    %481 = vmatprep.subr.mxu0 0.0
    %482 = vmatpush1.msra.mxu0 0.0
    %483 = vmatprep.subr.mxu0 0.0
    %484 = vmatpush1.msra.mxu0 0.0
    %485 = vmatprep.subr.mxu0 0.0
    %486 = vmatpush1.msra.mxu0 0.0
    %487 = vmatprep.subr.mxu0 0.0
    %488 = vmatpush1.msra.mxu0 0.0
    %489 = vmatprep.subr.mxu0 0.0
    %490 = vmatpush1.msra.mxu0 0.0
    %491 = vmatprep.subr.mxu0 0.0
    %492 = vmatpush1.msra.mxu0 0.0
    %493 = vmatprep.subr.mxu0 0.0
    %494 = vmatpush1.msra.mxu0 0.0
    %495 = vmatprep.subr.mxu0 0.0
    %496 = vmatpush1.msra.mxu0 0.0
    %497 = vmatprep.subr.mxu0 0.0
    %498 = vmatpush1.msra.mxu0 0.0
    %499 = vmatprep.subr.mxu0 0.0
    %500 = vmatpush1.msra.mxu0 0.0
    %501 = vmatprep.subr.mxu0 0.0
    %502 = vmatpush1.msra.mxu0 0.0
    %503 = vmatprep.subr.mxu0 0.0
    %504 = vmatpush1.msra.mxu0 0.0
    %505 = vmatprep.subr.mxu0 0.0
    %506 = vmatpush1.msra.mxu0 0.0
    %507 = vmatprep.subr.mxu0 0.0
    %508 = vmatpush1.msra.mxu0 0.0
    %509 = vmatprep.subr.mxu0 0.0
    %510 = vmatpush1.msra.mxu0 0.0
    %511 = vmatprep.mubr.f32.mxu0 0.0
    %512 = vmatmul.mubr.f32.gmra.mrb[0].mxu0 %v445
    %v513 = vpop.f32.mrb[0].mxu0
    %v514 = vadd.f32 0.0, %v513
    %v515 = vpop.f32.mrb[0].mxu0
    %516 = vdwg.mxu0
    %v517 = vadd.f32 %v441, %v514
    %v518 = vxor.u32 %v517, 2147483648
    %v519 = vmul.f32 %v518, 1.442695
    %v520 = vpow.pop %v519
    %v521 = vadd.f32 %v520, 1.0
    %v522 = vrcp.pop %v521
    %v523 = vmul.f32 1.0, %v522
    %v524 = vtanh.pop %v517
    %v525 = vmul.f32 %v523, %v429
    %527 = vrot.lane.b32.xlu0 %v524, 64
    %v528 = vpop.permute.xlu0 %527
    %v530 = vmul.f32 %v523, %v528
    %532 = vrot.lane.b32.xlu0 %v530, 32
    %v533 = vpop.permute.xlu0 %532
    %v535 = vadd.f32 %v525, %v533
    %v536 = vtanh.pop %v535
    %538 = vrot.lane.b32.xlu0 %v536, 64
    %v539 = vpop.permute.xlu0 %538
    %v541 = vmul.f32 %v523, %v539
    %v542 = vld [vmem:[#allocation2 + $0x4] sm:$0x1]
    %v543 = vld [vmem:[#allocation2 + $0xc] sm:$0x1]
    %v545 = vrot.slane %v543, 7
    %v547 = vsel %vm123, %v542, %v545
    %549 = vrot.lane.b32.xlu0 %v541, 32
    %v550 = vpop.permute.xlu0 %549
    %v551 = vsel %vm125, %v550, 0
    %553 = vmatprep.subr.mxu0 0.0
    %554 = vmatpush1.msra.mxu0 %v114
    %555 = vmatprep.subr.mxu0 0.0
    %556 = vmatpush1.msra.mxu0 %v115
    %557 = vmatprep.subr.mxu0 0.0
    %558 = vmatpush1.msra.mxu0 %v116
    %559 = vmatprep.subr.mxu0 0.0
    %560 = vmatpush1.msra.mxu0 %v117
    %561 = vmatprep.subr.mxu0 0.0
    %562 = vmatpush1.msra.mxu0 0.0
    %563 = vmatprep.subr.mxu0 0.0
    %564 = vmatpush1.msra.mxu0 0.0
    %565 = vmatprep.subr.mxu0 0.0
    %566 = vmatpush1.msra.mxu0 0.0
    %567 = vmatprep.subr.mxu0 0.0
    %568 = vmatpush1.msra.mxu0 0.0
    %569 = vmatprep.subr.mxu0 0.0
    %570 = vmatpush1.msra.mxu0 0.0
    %571 = vmatprep.subr.mxu0 0.0
    %572 = vmatpush1.msra.mxu0 0.0
    %573 = vmatprep.subr.mxu0 0.0
    %574 = vmatpush1.msra.mxu0 0.0
    %575 = vmatprep.subr.mxu0 0.0
    %576 = vmatpush1.msra.mxu0 0.0
    %577 = vmatprep.subr.mxu0 0.0
    %578 = vmatpush1.msra.mxu0 0.0
    %579 = vmatprep.subr.mxu0 0.0
    %580 = vmatpush1.msra.mxu0 0.0
    %581 = vmatprep.subr.mxu0 0.0
    %582 = vmatpush1.msra.mxu0 0.0
    %583 = vmatprep.subr.mxu0 0.0
    %584 = vmatpush1.msra.mxu0 0.0
    %585 = vmatprep.subr.mxu0 0.0
    %586 = vmatpush1.msra.mxu0 0.0
    %587 = vmatprep.subr.mxu0 0.0
    %588 = vmatpush1.msra.mxu0 0.0
    %589 = vmatprep.subr.mxu0 0.0
    %590 = vmatpush1.msra.mxu0 0.0
    %591 = vmatprep.subr.mxu0 0.0
    %592 = vmatpush1.msra.mxu0 0.0
    %593 = vmatprep.subr.mxu0 0.0
    %594 = vmatpush1.msra.mxu0 0.0
    %595 = vmatprep.subr.mxu0 0.0
    %596 = vmatpush1.msra.mxu0 0.0
    %597 = vmatprep.subr.mxu0 0.0
    %598 = vmatpush1.msra.mxu0 0.0
    %599 = vmatprep.subr.mxu0 0.0
    %600 = vmatpush1.msra.mxu0 0.0
    %601 = vmatprep.subr.mxu0 0.0
    %602 = vmatpush1.msra.mxu0 0.0
    %603 = vmatprep.subr.mxu0 0.0
    %604 = vmatpush1.msra.mxu0 0.0
    %605 = vmatprep.subr.mxu0 0.0
    %606 = vmatpush1.msra.mxu0 0.0
    %607 = vmatprep.subr.mxu0 0.0
    %608 = vmatpush1.msra.mxu0 0.0
    %609 = vmatprep.subr.mxu0 0.0
    %610 = vmatpush1.msra.mxu0 0.0
    %611 = vmatprep.subr.mxu0 0.0
    %612 = vmatpush1.msra.mxu0 0.0
    %613 = vmatprep.subr.mxu0 0.0
    %614 = vmatpush1.msra.mxu0 0.0
    %615 = vmatprep.subr.mxu0 0.0
    %616 = vmatpush1.msra.mxu0 0.0
    %617 = vmatprep.mubr.f32.mxu0 0.0
    %618 = vmatmul.mubr.f32.gmra.mrb[0].mxu0 %v551
    %v619 = vpop.f32.mrb[0].mxu0
    %v620 = vadd.f32 0.0, %v619
    %v621 = vpop.f32.mrb[0].mxu0
    %622 = vdwg.mxu0
    %v623 = vadd.f32 %v547, %v620
    %v624 = vxor.u32 %v623, 2147483648
    %v625 = vmul.f32 %v624, 1.442695
    %v626 = vpow.pop %v625
    %v627 = vadd.f32 %v626, 1.0
    %v628 = vrcp.pop %v627
    %v629 = vmul.f32 1.0, %v628
    %v630 = vtanh.pop %v623
    %v631 = vmul.f32 %v629, %v535
    %633 = vrot.lane.b32.xlu0 %v630, 64
    %v634 = vpop.permute.xlu0 %633
    %v636 = vmul.f32 %v629, %v634
    %638 = vrot.lane.b32.xlu0 %v636, 32
    %v639 = vpop.permute.xlu0 %638
    %v641 = vadd.f32 %v631, %v639
    %v642 = vtanh.pop %v641
    %644 = vrot.lane.b32.xlu0 %v642, 64
    %v645 = vpop.permute.xlu0 %644
    %v647 = vmul.f32 %v629, %v645
    %v648 = vld [vmem:[#allocation2 + $0x5] sm:$0x1]
    %v649 = vld [vmem:[#allocation2 + $0xd] sm:$0x1]
    %v651 = vrot.slane %v649, 7
    %v653 = vsel %vm123, %v648, %v651
    %655 = vrot.lane.b32.xlu0 %v647, 32
    %v656 = vpop.permute.xlu0 %655
    %v657 = vsel %vm125, %v656, 0
    %659 = vmatprep.subr.mxu0 0.0
    %660 = vmatpush1.msra.mxu0 %v114
    %661 = vmatprep.subr.mxu0 0.0
    %662 = vmatpush1.msra.mxu0 %v115
    %663 = vmatprep.subr.mxu0 0.0
    %664 = vmatpush1.msra.mxu0 %v116
    %665 = vmatprep.subr.mxu0 0.0
    %666 = vmatpush1.msra.mxu0 %v117
    %667 = vmatprep.subr.mxu0 0.0
    %668 = vmatpush1.msra.mxu0 0.0
    %669 = vmatprep.subr.mxu0 0.0
    %670 = vmatpush1.msra.mxu0 0.0
    %671 = vmatprep.subr.mxu0 0.0
    %672 = vmatpush1.msra.mxu0 0.0
    %673 = vmatprep.subr.mxu0 0.0
    %674 = vmatpush1.msra.mxu0 0.0
    %675 = vmatprep.subr.mxu0 0.0
    %676 = vmatpush1.msra.mxu0 0.0
    %677 = vmatprep.subr.mxu0 0.0
    %678 = vmatpush1.msra.mxu0 0.0
    %679 = vmatprep.subr.mxu0 0.0
    %680 = vmatpush1.msra.mxu0 0.0
    %681 = vmatprep.subr.mxu0 0.0
    %682 = vmatpush1.msra.mxu0 0.0
    %683 = vmatprep.subr.mxu0 0.0
    %684 = vmatpush1.msra.mxu0 0.0
    %685 = vmatprep.subr.mxu0 0.0
    %686 = vmatpush1.msra.mxu0 0.0
    %687 = vmatprep.subr.mxu0 0.0
    %688 = vmatpush1.msra.mxu0 0.0
    %689 = vmatprep.subr.mxu0 0.0
    %690 = vmatpush1.msra.mxu0 0.0
    %691 = vmatprep.subr.mxu0 0.0
    %692 = vmatpush1.msra.mxu0 0.0
    %693 = vmatprep.subr.mxu0 0.0
    %694 = vmatpush1.msra.mxu0 0.0
    %695 = vmatprep.subr.mxu0 0.0
    %696 = vmatpush1.msra.mxu0 0.0
    %697 = vmatprep.subr.mxu0 0.0
    %698 = vmatpush1.msra.mxu0 0.0
    %699 = vmatprep.subr.mxu0 0.0
    %700 = vmatpush1.msra.mxu0 0.0
    %701 = vmatprep.subr.mxu0 0.0
    %702 = vmatpush1.msra.mxu0 0.0
    %703 = vmatprep.subr.mxu0 0.0
    %704 = vmatpush1.msra.mxu0 0.0
    %705 = vmatprep.subr.mxu0 0.0
    %706 = vmatpush1.msra.mxu0 0.0
    %707 = vmatprep.subr.mxu0 0.0
    %708 = vmatpush1.msra.mxu0 0.0
    %709 = vmatprep.subr.mxu0 0.0
    %710 = vmatpush1.msra.mxu0 0.0
    %711 = vmatprep.subr.mxu0 0.0
    %712 = vmatpush1.msra.mxu0 0.0
    %713 = vmatprep.subr.mxu0 0.0
    %714 = vmatpush1.msra.mxu0 0.0
    %715 = vmatprep.subr.mxu0 0.0
    %716 = vmatpush1.msra.mxu0 0.0
    %717 = vmatprep.subr.mxu0 0.0
    %718 = vmatpush1.msra.mxu0 0.0
    %719 = vmatprep.subr.mxu0 0.0
    %720 = vmatpush1.msra.mxu0 0.0
    %721 = vmatprep.subr.mxu0 0.0
    %722 = vmatpush1.msra.mxu0 0.0
    %723 = vmatprep.mubr.f32.mxu0 0.0
    %724 = vmatmul.mubr.f32.gmra.mrb[0].mxu0 %v657
    %v725 = vpop.f32.mrb[0].mxu0
    %v726 = vadd.f32 0.0, %v725
    %v727 = vpop.f32.mrb[0].mxu0
    %728 = vdwg.mxu0
    %v729 = vadd.f32 %v653, %v726
    %v730 = vxor.u32 %v729, 2147483648
    %v731 = vmul.f32 %v730, 1.442695
    %v732 = vpow.pop %v731
    %v733 = vadd.f32 %v732, 1.0
    %v734 = vrcp.pop %v733
    %v735 = vmul.f32 1.0, %v734
    %v736 = vtanh.pop %v729
    %v737 = vmul.f32 %v735, %v641
    %739 = vrot.lane.b32.xlu0 %v736, 64
    %v740 = vpop.permute.xlu0 %739
    %v742 = vmul.f32 %v735, %v740
    %744 = vrot.lane.b32.xlu0 %v742, 32
    %v745 = vpop.permute.xlu0 %744
    %v747 = vadd.f32 %v737, %v745
    %v748 = vtanh.pop %v747
    %750 = vrot.lane.b32.xlu0 %v748, 64
    %v751 = vpop.permute.xlu0 %750
    %v753 = vmul.f32 %v735, %v751
    %v754 = vld [vmem:[#allocation2 + $0x6] sm:$0x1]
    %v755 = vld [vmem:[#allocation2 + $0xe] sm:$0x1]
    %v757 = vrot.slane %v755, 7
    %v759 = vsel %vm123, %v754, %v757
    %761 = vrot.lane.b32.xlu0 %v753, 32
    %v762 = vpop.permute.xlu0 %761
    %v763 = vsel %vm125, %v762, 0
    %765 = vmatprep.subr.mxu0 0.0
    %766 = vmatpush1.msra.mxu0 %v114
    %767 = vmatprep.subr.mxu0 0.0
    %768 = vmatpush1.msra.mxu0 %v115
    %769 = vmatprep.subr.mxu0 0.0
    %770 = vmatpush1.msra.mxu0 %v116
    %771 = vmatprep.subr.mxu0 0.0
    %772 = vmatpush1.msra.mxu0 %v117
    %773 = vmatprep.subr.mxu0 0.0
    %774 = vmatpush1.msra.mxu0 0.0
    %775 = vmatprep.subr.mxu0 0.0
    %776 = vmatpush1.msra.mxu0 0.0
    %777 = vmatprep.subr.mxu0 0.0
    %778 = vmatpush1.msra.mxu0 0.0
    %779 = vmatprep.subr.mxu0 0.0
    %780 = vmatpush1.msra.mxu0 0.0
    %781 = vmatprep.subr.mxu0 0.0
    %782 = vmatpush1.msra.mxu0 0.0
    %783 = vmatprep.subr.mxu0 0.0
    %784 = vmatpush1.msra.mxu0 0.0
    %785 = vmatprep.subr.mxu0 0.0
    %786 = vmatpush1.msra.mxu0 0.0
    %787 = vmatprep.subr.mxu0 0.0
    %788 = vmatpush1.msra.mxu0 0.0
    %789 = vmatprep.subr.mxu0 0.0
    %790 = vmatpush1.msra.mxu0 0.0
    %791 = vmatprep.subr.mxu0 0.0
    %792 = vmatpush1.msra.mxu0 0.0
    %793 = vmatprep.subr.mxu0 0.0
    %794 = vmatpush1.msra.mxu0 0.0
    %795 = vmatprep.subr.mxu0 0.0
    %796 = vmatpush1.msra.mxu0 0.0
    %797 = vmatprep.subr.mxu0 0.0
    %798 = vmatpush1.msra.mxu0 0.0
    %799 = vmatprep.subr.mxu0 0.0
    %800 = vmatpush1.msra.mxu0 0.0
    %801 = vmatprep.subr.mxu0 0.0
    %802 = vmatpush1.msra.mxu0 0.0
    %803 = vmatprep.subr.mxu0 0.0
    %804 = vmatpush1.msra.mxu0 0.0
    %805 = vmatprep.subr.mxu0 0.0
    %806 = vmatpush1.msra.mxu0 0.0
    %807 = vmatprep.subr.mxu0 0.0
    %808 = vmatpush1.msra.mxu0 0.0
    %809 = vmatprep.subr.mxu0 0.0
    %810 = vmatpush1.msra.mxu0 0.0
    %811 = vmatprep.subr.mxu0 0.0
    %812 = vmatpush1.msra.mxu0 0.0
    %813 = vmatprep.subr.mxu0 0.0
    %814 = vmatpush1.msra.mxu0 0.0
    %815 = vmatprep.subr.mxu0 0.0
    %816 = vmatpush1.msra.mxu0 0.0
    %817 = vmatprep.subr.mxu0 0.0
    %818 = vmatpush1.msra.mxu0 0.0
    %819 = vmatprep.subr.mxu0 0.0
    %820 = vmatpush1.msra.mxu0 0.0
    %821 = vmatprep.subr.mxu0 0.0
    %822 = vmatpush1.msra.mxu0 0.0
    %823 = vmatprep.subr.mxu0 0.0
    %824 = vmatpush1.msra.mxu0 0.0
    %825 = vmatprep.subr.mxu0 0.0
    %826 = vmatpush1.msra.mxu0 0.0
    %827 = vmatprep.subr.mxu0 0.0
    %828 = vmatpush1.msra.mxu0 0.0
    %829 = vmatprep.mubr.f32.mxu0 0.0
    %830 = vmatmul.mubr.f32.gmra.mrb[0].mxu0 %v763
    %v831 = vpop.f32.mrb[0].mxu0
    %v832 = vadd.f32 0.0, %v831
    %v833 = vpop.f32.mrb[0].mxu0
    %834 = vdwg.mxu0
    %v835 = vadd.f32 %v759, %v832
    %v836 = vxor.u32 %v835, 2147483648
    %v837 = vmul.f32 %v836, 1.442695
    %v838 = vpow.pop %v837
    %v839 = vadd.f32 %v838, 1.0
    %v840 = vrcp.pop %v839
    %v841 = vmul.f32 1.0, %v840
    %v842 = vtanh.pop %v835
    %v843 = vmul.f32 %v841, %v747
    %845 = vrot.lane.b32.xlu0 %v842, 64
    %v846 = vpop.permute.xlu0 %845
    %v848 = vmul.f32 %v841, %v846
    %850 = vrot.lane.b32.xlu0 %v848, 32
    %v851 = vpop.permute.xlu0 %850
    %v853 = vadd.f32 %v843, %v851
    %v854 = vtanh.pop %v853
    %856 = vrot.lane.b32.xlu0 %v854, 64
    %v857 = vpop.permute.xlu0 %856
    %v859 = vmul.f32 %v841, %v857
    %v860 = vld [vmem:[#allocation2 + $0x7] sm:$0x1]
    %v861 = vld [vmem:[#allocation2 + $0xf] sm:$0x1]
    %v863 = vrot.slane %v861, 7
    %v865 = vsel %vm123, %v860, %v863
    %867 = vrot.lane.b32.xlu0 %v859, 32
    %v868 = vpop.permute.xlu0 %867
    %v869 = vsel %vm125, %v868, 0
    %871 = vmatprep.subr.mxu0 0.0
    %872 = vmatpush1.msra.mxu0 %v114
    %873 = vmatprep.subr.mxu0 0.0
    %874 = vmatpush1.msra.mxu0 %v115
    %875 = vmatprep.subr.mxu0 0.0
    %876 = vmatpush1.msra.mxu0 %v116
    %877 = vmatprep.subr.mxu0 0.0
    %878 = vmatpush1.msra.mxu0 %v117
    %879 = vmatprep.subr.mxu0 0.0
    %880 = vmatpush1.msra.mxu0 0.0
    %881 = vmatprep.subr.mxu0 0.0
    %882 = vmatpush1.msra.mxu0 0.0
    %883 = vmatprep.subr.mxu0 0.0
    %884 = vmatpush1.msra.mxu0 0.0
    %885 = vmatprep.subr.mxu0 0.0
    %886 = vmatpush1.msra.mxu0 0.0
    %887 = vmatprep.subr.mxu0 0.0
    %888 = vmatpush1.msra.mxu0 0.0
    %889 = vmatprep.subr.mxu0 0.0
    %890 = vmatpush1.msra.mxu0 0.0
    %891 = vmatprep.subr.mxu0 0.0
    %892 = vmatpush1.msra.mxu0 0.0
    %893 = vmatprep.subr.mxu0 0.0
    %894 = vmatpush1.msra.mxu0 0.0
    %895 = vmatprep.subr.mxu0 0.0
    %896 = vmatpush1.msra.mxu0 0.0
    %897 = vmatprep.subr.mxu0 0.0
    %898 = vmatpush1.msra.mxu0 0.0
    %899 = vmatprep.subr.mxu0 0.0
    %900 = vmatpush1.msra.mxu0 0.0
    %901 = vmatprep.subr.mxu0 0.0
    %902 = vmatpush1.msra.mxu0 0.0
    %903 = vmatprep.subr.mxu0 0.0
    %904 = vmatpush1.msra.mxu0 0.0
    %905 = vmatprep.subr.mxu0 0.0
    %906 = vmatpush1.msra.mxu0 0.0
    %907 = vmatprep.subr.mxu0 0.0
    %908 = vmatpush1.msra.mxu0 0.0
    %909 = vmatprep.subr.mxu0 0.0
    %910 = vmatpush1.msra.mxu0 0.0
    %911 = vmatprep.subr.mxu0 0.0
    %912 = vmatpush1.msra.mxu0 0.0
    %913 = vmatprep.subr.mxu0 0.0
    %914 = vmatpush1.msra.mxu0 0.0
    %915 = vmatprep.subr.mxu0 0.0
    %916 = vmatpush1.msra.mxu0 0.0
    %917 = vmatprep.subr.mxu0 0.0
    %918 = vmatpush1.msra.mxu0 0.0
    %919 = vmatprep.subr.mxu0 0.0
    %920 = vmatpush1.msra.mxu0 0.0
    %921 = vmatprep.subr.mxu0 0.0
    %922 = vmatpush1.msra.mxu0 0.0
    %923 = vmatprep.subr.mxu0 0.0
    %924 = vmatpush1.msra.mxu0 0.0
    %925 = vmatprep.subr.mxu0 0.0
    %926 = vmatpush1.msra.mxu0 0.0
    %927 = vmatprep.subr.mxu0 0.0
    %928 = vmatpush1.msra.mxu0 0.0
    %929 = vmatprep.subr.mxu0 0.0
    %930 = vmatpush1.msra.mxu0 0.0
    %931 = vmatprep.subr.mxu0 0.0
    %932 = vmatpush1.msra.mxu0 0.0
    %933 = vmatprep.subr.mxu0 0.0
    %934 = vmatpush1.msra.mxu0 0.0
    %935 = vmatprep.mubr.f32.mxu0 0.0
    %936 = vmatmul.mubr.f32.gmra.mrb[0].mxu0 %v869
    %v937 = vpop.f32.mrb[0].mxu0
    %v938 = vadd.f32 0.0, %v937
    %v939 = vpop.f32.mrb[0].mxu0
    %940 = vdwg.mxu0
    %v941 = vadd.f32 %v865, %v938
    %v942 = vxor.u32 %v941, 2147483648
    %v943 = vmul.f32 %v942, 1.442695
    %v944 = vpow.pop %v943
    %v945 = vadd.f32 %v944, 1.0
    %v946 = vrcp.pop %v945
    %v947 = vmul.f32 1.0, %v946
    %v948 = vtanh.pop %v941
    %v949 = vmul.f32 %v947, %v853
    %951 = vrot.lane.b32.xlu0 %v948, 64
    %v952 = vpop.permute.xlu0 %951
    %v954 = vmul.f32 %v947, %v952
    %956 = vrot.lane.b32.xlu0 %v954, 32
    %v957 = vpop.permute.xlu0 %956
    %v959 = vadd.f32 %v949, %v957
    %v960 = vtanh.pop %v959
    %962 = vrot.lane.b32.xlu0 %v960, 64
    %v963 = vpop.permute.xlu0 %962
    %v965 = vmul.f32 %v947, %v963
    %v966 = vld [vmem:[#allocation3] sm:$0xff]
    %v967 = vld [vmem:[#allocation3 + $0x8] sm:$0xff]
    %v968 = vld [vmem:[#allocation3 + $0x10] sm:$0xff]
    %v969 = vld [vmem:[#allocation3 + $0x18] sm:$0xff]
    %v970 = vld [vmem:[#allocation6] sm:$0x1]
    %v972 = vlaneseq
    %v973 = vshrl.u32 %v972, 7
    %v974 = vsub.s32 0, %v973
    %v975 = vrot.slane %v970, %v974
    %978 = vrot.lane.b32.xlu0 %v965, 32
    %v979 = vpop.permute.xlu0 %978
    %v980 = vsel %vm125, %v979, 0
    %982 = vmatprep.subr.mxu0 0.0
    %983 = vmatpush1.msra.mxu0 %v966
    %984 = vmatprep.subr.mxu0 0.0
    %985 = vmatpush1.msra.mxu0 %v967
    %986 = vmatprep.subr.mxu0 0.0
    %987 = vmatpush1.msra.mxu0 %v968
    %988 = vmatprep.subr.mxu0 0.0
    %989 = vmatpush1.msra.mxu0 %v969
    %990 = vmatprep.subr.mxu0 0.0
    %991 = vmatpush1.msra.mxu0 0.0
    %992 = vmatprep.subr.mxu0 0.0
    %993 = vmatpush1.msra.mxu0 0.0
    %994 = vmatprep.subr.mxu0 0.0
    %995 = vmatpush1.msra.mxu0 0.0
    %996 = vmatprep.subr.mxu0 0.0
    %997 = vmatpush1.msra.mxu0 0.0
    %998 = vmatprep.subr.mxu0 0.0
    %999 = vmatpush1.msra.mxu0 0.0
    %1000 = vmatprep.subr.mxu0 0.0
    %1001 = vmatpush1.msra.mxu0 0.0
    %1002 = vmatprep.subr.mxu0 0.0
    %1003 = vmatpush1.msra.mxu0 0.0
    %1004 = vmatprep.subr.mxu0 0.0
    %1005 = vmatpush1.msra.mxu0 0.0
    %1006 = vmatprep.subr.mxu0 0.0
    %1007 = vmatpush1.msra.mxu0 0.0
    %1008 = vmatprep.subr.mxu0 0.0
    %1009 = vmatpush1.msra.mxu0 0.0
    %1010 = vmatprep.subr.mxu0 0.0
    %1011 = vmatpush1.msra.mxu0 0.0
    %1012 = vmatprep.subr.mxu0 0.0
    %1013 = vmatpush1.msra.mxu0 0.0
    %1014 = vmatprep.subr.mxu0 0.0
    %1015 = vmatpush1.msra.mxu0 0.0
    %1016 = vmatprep.subr.mxu0 0.0
    %1017 = vmatpush1.msra.mxu0 0.0
    %1018 = vmatprep.subr.mxu0 0.0
    %1019 = vmatpush1.msra.mxu0 0.0
    %1020 = vmatprep.subr.mxu0 0.0
    %1021 = vmatpush1.msra.mxu0 0.0
    %1022 = vmatprep.subr.mxu0 0.0
    %1023 = vmatpush1.msra.mxu0 0.0
    %1024 = vmatprep.subr.mxu0 0.0
    %1025 = vmatpush1.msra.mxu0 0.0
    %1026 = vmatprep.subr.mxu0 0.0
    %1027 = vmatpush1.msra.mxu0 0.0
    %1028 = vmatprep.subr.mxu0 0.0
    %1029 = vmatpush1.msra.mxu0 0.0
    %1030 = vmatprep.subr.mxu0 0.0
    %1031 = vmatpush1.msra.mxu0 0.0
    %1032 = vmatprep.subr.mxu0 0.0
    %1033 = vmatpush1.msra.mxu0 0.0
    %1034 = vmatprep.subr.mxu0 0.0
    %1035 = vmatpush1.msra.mxu0 0.0
    %1036 = vmatprep.subr.mxu0 0.0
    %1037 = vmatpush1.msra.mxu0 0.0
    %1038 = vmatprep.subr.mxu0 0.0
    %1039 = vmatpush1.msra.mxu0 0.0
    %1040 = vmatprep.subr.mxu0 0.0
    %1041 = vmatpush1.msra.mxu0 0.0
    %1042 = vmatprep.subr.mxu0 0.0
    %1043 = vmatpush1.msra.mxu0 0.0
    %1044 = vmatprep.subr.mxu0 0.0
    %1045 = vmatpush1.msra.mxu0 0.0
    %1046 = vmatprep.mubr.f32.mxu0 0.0
    %1047 = vmatmul.mubr.f32.gmra.mrb[0].mxu0 %v980
    %v1048 = vpop.f32.mrb[0].mxu0
    %v1049 = vadd.f32 %v975, %v1048
    %v1050 = vpop.f32.mrb[0].mxu0
    %1051 = vdwg.mxu0
    %1052 = vst [vmem:[#allocation8] sm:$0x3] %v1049
    // Predicated region
    $region34: #{lstm_model_forward.1} parent=1 // pred_check
      _
    $region35: #{lstm_model_forward.1} parent=1 // pred_check_branch
      %1054 = sbr.rel (0) target = $region37
    $region36: #{lstm_model_forward.1} parent=1 // pred_region
      %s1056 = ssub.s32 32, 32
      %1057 = vsyncadd [#allocation5], %s1056
      %s1059 = sshll.u32 [#allocation8], 4
      %s1060 = int_to_ptr.vmem [resolvable:$true] %s1059
      %1062 = dma.vmem_to_hbm [thread:$0]  %s1060, 32, %s6, [#allocation5]
    $region37: #{lstm_model_forward.1} parent=1 // pred_fallthru
      _
    // Predicated region
    $region38: #{lstm_model_forward.1} parent=1 // pred_check
      _
    $region39: #{lstm_model_forward.1} parent=1 // pred_check_branch
      %1064 = sbr.rel (0) target = $region41
    $region40: #{lstm_model_forward.1} parent=1 // pred_region
      %1065 = dma.done [#allocation5], 32
    $region41: #{lstm_model_forward.1} parent=1 // pred_fallthru
      _
    %1066 = vsyncpa [#allocation4], 1
    %1067 = vsyncpa [#allocation7], 1
    %1068 = vsyncpa [#allocation5], 1

</llo_original>
